<compile_context>
chip_gen: v7x
topology: tpu7x:2x2x1
jax: 0.10.0
libtpu: 0.0.40
codegen_flags: <defaults>
</compile_context>

<pallas_src>
import functools
import math

import jax
import jax.numpy as jnp
from jax.experimental import pallas as pl
from jax.experimental.pallas import tpu as pltpu


def _round_up(x, m):
    return (x + m - 1) // m * m


def _pad_cast_2d(a, target_shape, dtype):
    """Pad-with-zeros / cast only if actually needed (no-op for aligned args)."""
    pads = tuple((0, t - s) for s, t in zip(a.shape, target_shape))
    if any(p[1] for p in pads):
        a = jnp.pad(a, pads)
    if a.dtype != dtype:
        a = a.astype(dtype)
    return a


def _ffn_kernel(seed_ref, x_ref, w1_ref, b1_ref, w2_ref, b2_ref, o_ref, acc_ref,
                *, training, dropout_rate, threshold, finalize_scale, tm, tf):
    # x_ref : (TM, Dm)    w1_ref: (Dm, TF)   b1_ref: (1, TF)
    # w2_ref: (TF, Dm)    b2_ref: (1, Dm)    o_ref : (TM, Dm)
    # acc_ref: f32 VMEM scratch (TM, Dm), accumulates over the d_ff (j) axis.
    j = pl.program_id(1)

    @pl.when(j == 0)
    def _():
        acc_ref[...] = jnp.zeros_like(acc_ref)

    h = jnp.dot(x_ref[...], w1_ref[...], preferred_element_type=jnp.float32)
    h = jnp.maximum(h + b1_ref[...], 0.0)  # bias + ReLU in f32

    if training and dropout_rate > 0.0:
        if dropout_rate >= 1.0:
            h = jnp.zeros_like(h)
        else:
            # Counter-based hash PRNG keyed on (seed, absolute row, absolute
            # d_ff column): tile-layout independent stream per element, pure
            # uint32 VPU ops (lowers on TPU and in interpret mode).
            # TODO(synk): semantics match torch dropout, but the realized mask
            # will not bit-match torch's RNG stream.
            row_off = pl.program_id(0) * tm
            col_off = j * tf
            r = (jax.lax.broadcasted_iota(jnp.int32, h.shape, 0) + row_off)
            c = (jax.lax.broadcasted_iota(jnp.int32, h.shape, 1) + col_off)
            bits = (r.astype(jnp.uint32) * jnp.uint32(0x9E3779B1)
                    ^ c.astype(jnp.uint32) * jnp.uint32(0x85EBCA77))
            bits = bits + seed_ref[0].astype(jnp.uint32) * jnp.uint32(0xC2B2AE3D)
            # splitmix32-style finalizer
            bits = (bits ^ (bits >> 16)) * jnp.uint32(0x7FEB352D)
            bits = (bits ^ (bits >> 15)) * jnp.uint32(0x846CA68B)
            bits = bits ^ (bits >> 16)
            # Keep-prob = 1 - p; inv_keep scaling is deferred to finalize.
            h = jnp.where(bits >= jnp.uint32(threshold), h, 0.0)

    acc_ref[...] += jnp.dot(h.astype(w2_ref.dtype), w2_ref[...],
                            preferred_element_type=jnp.float32)

    @pl.when(j == pl.num_programs(1) - 1)
    def _():
        acc = acc_ref[...]
        if finalize_scale != 1.0:
            acc = acc * finalize_scale  # single (tm, dm) scale per row tile
        o_ref[...] = (acc + b2_ref[...]).astype(o_ref.dtype)


def positionwise_feed_forward(x, w1_t, b1, w2_t, b2, *, dropout_rate=0.1,
                              training=False, seed=0,
                              row_tile=768, ff_tile=512,
                              compute_dtype=jnp.bfloat16):
    """x: [B, S, d_model]. Weights stored transposed: w1_t (d_model, d_ff),
    w2_t (d_ff, d_model). Returns [B, S, d_model] in x.dtype."""
    B, S, d_model = x.shape
    d_ff = w1_t.shape[1]
    rows = B * S
    out_dtype = x.dtype

    # Padded / tiled geometry: lane dims multiples of 128, sublane of 8.
    dm_p = _round_up(d_model, 128)
    tf = min(int(ff_tile), _round_up(d_ff, 128))
    dff_p = _round_up(d_ff, tf)
    tm = min(int(row_tile), _round_up(rows, 8))
    rows_p = _round_up(rows, tm)
    # Note: for v7x megacore, rows_p // tm >= 2 keeps both TensorCores busy.

    # Zero padding is exact: padded d_ff lanes give relu(0)=0 and contribute 0
    # through zero rows of w2; padded d_model / row lanes are sliced off below.
    # Pad/cast are no-ops when inputs are already aligned and in compute_dtype.
    x2d = _pad_cast_2d(x.reshape(rows, d_model), (rows_p, dm_p), compute_dtype)
    w1p = _pad_cast_2d(w1_t, (dm_p, dff_p), compute_dtype)
    w2p = _pad_cast_2d(w2_t, (dff_p, dm_p), compute_dtype)
    b1p = _pad_cast_2d(b1.reshape(1, d_ff), (1, dff_p), jnp.float32)
    b2p = _pad_cast_2d(b2.reshape(1, d_model), (1, dm_p), jnp.float32)
    seed_arr = jnp.array([int(seed) & 0x7FFFFFFF], dtype=jnp.int32)

    # Dropout threshold clamped so p == 1.0 does not wrap uint32.
    threshold = min(int(round(float(dropout_rate) * (2 ** 32))), 2 ** 32 - 1)
    if training and 0.0 < dropout_rate < 1.0:
        finalize_scale = 1.0 / (1.0 - float(dropout_rate))
    else:
        finalize_scale = 1.0

    kernel = functools.partial(_ffn_kernel,
                               training=bool(training),
                               dropout_rate=float(dropout_rate),
                               threshold=threshold,
                               finalize_scale=float(finalize_scale),
                               tm=tm, tf=tf)

    grid = (rows_p // tm, dff_p // tf)

    # VMEM budget: double-buffered blocks + accumulator + the (tm, tf) f32 `h`
    # intermediate and its compute-dtype copy.  Clamped to 56 MiB so it stays
    # below v7x's 64 MiB physical VMEM (v5e/v6e have 128 MiB).
    cbytes = jnp.dtype(compute_dtype).itemsize
    obytes = jnp.dtype(out_dtype).itemsize
    block_bytes = (2 * tm * dm_p * cbytes        # x block (double-buffered)
                   + 2 * dm_p * tf * cbytes      # w1 block
                   + 2 * tf * dm_p * cbytes      # w2 block
                   + 2 * 8 * tf * 4              # b1 block (sublane padded)
                   + 2 * 8 * dm_p * 4            # b2 block
                   + 2 * tm * dm_p * obytes      # out block
                   + tm * dm_p * 4               # f32 accumulator scratch
                   + tm * tf * 4                 # h (f32)
                   + tm * tf * cbytes)           # h cast for second matmul
    vmem_limit = int(min(block_bytes + (8 << 20), 56 << 20))

    # TODO(synk): if a v6e profile still shows exposed weight DMA, set
    # pipeline_mode=pl.Buffered(3) on the w1/w2 BlockSpecs (re-check VMEM on v7x).
    out2d = pl.pallas_call(
        kernel,
        out_shape=jax.ShapeDtypeStruct((rows_p, dm_p), out_dtype),
        grid_spec=pltpu.PrefetchScalarGridSpec(
            num_scalar_prefetch=1,
            grid=grid,
            in_specs=[
                pl.BlockSpec((tm, dm_p), lambda i, j, seed: (i, 0)),
                pl.BlockSpec((dm_p, tf), lambda i, j, seed: (0, j)),
                pl.BlockSpec((1, tf),    lambda i, j, seed: (0, j)),
                pl.BlockSpec((tf, dm_p), lambda i, j, seed: (j, 0)),
                pl.BlockSpec((1, dm_p),  lambda i, j, seed: (0, 0)),
            ],
            out_specs=pl.BlockSpec((tm, dm_p), lambda i, j, seed: (i, 0)),
            scratch_shapes=[pltpu.VMEM((tm, dm_p), jnp.float32)],
        ),
        compiler_params=pltpu.CompilerParams(
            dimension_semantics=("parallel", "arbitrary"),
            vmem_limit_bytes=vmem_limit),
    )(seed_arr, x2d, w1p, b1p, w2p, b2p)

    return out2d[:rows, :d_model].reshape(B, S, d_model)


def init_params(key, d_model, d_ff):
    """Deterministic init mimicking nn.Linear default (uniform +/- 1/sqrt(fan_in))."""
    k1, k2, k3, k4 = jax.random.split(key, 4)
    bound1 = 1.0 / math.sqrt(d_model)
    bound2 = 1.0 / math.sqrt(d_ff)
    # Stored already-transposed: (in, out).
    w1_t = jax.random.uniform(k1, (d_model, d_ff), jnp.float32, -bound1, bound1)
    b1   = jax.random.uniform(k2, (d_ff,),         jnp.float32, -bound1, bound1)
    w2_t = jax.random.uniform(k3, (d_ff, d_model), jnp.float32, -bound2, bound2)
    b2   = jax.random.uniform(k4, (d_model,),      jnp.float32, -bound2, bound2)
    return w1_t, b1, w2_t, b2


if __name__ == "__main__":
    key = jax.random.PRNGKey(0)
    B, S, d_model, d_ff = 2, 8, 32, 64

    kx, kp = jax.random.split(key)
    x = jax.random.normal(kx, (B, S, d_model), dtype=jnp.float32)
    w1_t, b1, w2_t, b2 = init_params(kp, d_model, d_ff)

    # Eval-mode forward (dropout is identity, matching module.eval()).
    out = positionwise_feed_forward(x, w1_t, b1, w2_t, b2,
                                    dropout_rate=0.1, training=False)
    out = jax.block_until_ready(out)
    assert out.shape == (B, S, d_model)

    # Plain-JAX reference mirroring the kernel's bf16-MXU / f32-accumulate math.
    xb = x.reshape(-1, d_model).astype(jnp.bfloat16)
    w1b = w1_t.astype(jnp.bfloat16)
    w2b = w2_t.astype(jnp.bfloat16)
    h_ref = jnp.maximum(
        jnp.dot(xb, w1b, preferred_element_type=jnp.float32) + b1, 0.0)
    ref = (jnp.dot(h_ref.astype(jnp.bfloat16), w2b,
                   preferred_element_type=jnp.float32) + b2).reshape(B, S, d_model)
    assert jnp.allclose(out, ref, atol=1e-3, rtol=1e-3), (
        float(jnp.max(jnp.abs(out - ref))))

    # Exercise the training-mode (dropout) path once; semantics match torch
    # dropout but randoms do not bit-match torch's RNG stream.
    out_tr = positionwise_feed_forward(x, w1_t, b1, w2_t, b2,
                                       dropout_rate=0.1, training=True, seed=123)
    out_tr = jax.block_until_ready(out_tr)
    assert out_tr.shape == (B, S, d_model)
    assert bool(jnp.isfinite(out_tr).all())

    print("KERNEL_OK")
</pallas_src>

<mosaic_0001>
module attributes {stable_mosaic.version = 11 : i64} {
  func.func @_ffn_kernel(%arg0: i32, %arg1: i32, %arg2: memref<1xi32, #tpu.memory_space<smem>>, %arg3: memref<16x128xbf16, #tpu.memory_space<vmem>>, %arg4: memref<128x128xbf16, #tpu.memory_space<vmem>>, %arg5: memref<1x128xf32, #tpu.memory_space<vmem>>, %arg6: memref<128x128xbf16, #tpu.memory_space<vmem>>, %arg7: memref<1x128xf32, #tpu.memory_space<vmem>>, %arg8: memref<16x128xf32, #tpu.memory_space<vmem>>, %arg9: memref<16x128xf32, #tpu.memory_space<vmem>>) attributes {dimension_semantics = [#tpu.dimension_semantics<parallel>, #tpu.dimension_semantics<arbitrary>], iteration_bounds = array<i64: 1, 1>, scalar_prefetch = 1 : i64, scratch_operands = 1 : i64, tpu.core_type = #tpu.core_type<tc>, window_params = [{transform_indices = @transform_0, window_bounds = array<i64: 16, 128>}, {transform_indices = @transform_1, window_bounds = array<i64: 128, 128>}, {transform_indices = @transform_2, window_bounds = array<i64: 1, 128>}, {transform_indices = @transform_3, window_bounds = array<i64: 128, 128>}, {pipeline_mode = #tpu.pipeline_mode<synchronous>, transform_indices = @transform_4, window_bounds = array<i64: 1, 128>}, {transform_indices = @transform_5, window_bounds = array<i64: 16, 128>}]} {
    %c0_i32 = arith.constant 0 : i32
    %0 = arith.cmpi eq, %arg1, %c0_i32 : i32
    %1 = arith.extui %0 : i1 to i32
    %c0_i32_0 = arith.constant 0 : i32
    %2 = arith.cmpi ne, %1, %c0_i32_0 : i32
    scf.if %2 {
      %cst_16 = arith.constant 0.000000e+00 : f32
      %20 = vector.broadcast %cst_16 : f32 to vector<16x128xf32>
      %c0_17 = arith.constant 0 : index
      %c0_18 = arith.constant 0 : index
      %21 = vector.load %arg9[%c0_17, %c0_18] : memref<16x128xf32, #tpu.memory_space<vmem>>, vector<16x128xf32>
      tpu.vector_store %arg9[%c0_17, %c0_18], %20 {strides = array<i32>} : memref<16x128xf32, #tpu.memory_space<vmem>>, vector<16x128xf32>,
    } else {
    }
    %c0 = arith.constant 0 : index
    %c0_1 = arith.constant 0 : index
    %3 = vector.load %arg3[%c0, %c0_1] : memref<16x128xbf16, #tpu.memory_space<vmem>>, vector<16x128xbf16>
    %c0_2 = arith.constant 0 : index
    %c0_3 = arith.constant 0 : index
    %4 = vector.load %arg4[%c0_2, %c0_3] : memref<128x128xbf16, #tpu.memory_space<vmem>>, vector<128x128xbf16>
    %cst = arith.constant dense<0.000000e+00> : vector<16x128xf32>
    %5 = tpu.matmul %3, %4, %cst {dimension_numbers = #tpu.dot_dimension_numbers<[1], [0], [0], [1], [0, 0, 1, 1], [], []>} : vector<16x128xbf16>, vector<128x128xbf16>, vector<16x128xf32> -> vector<16x128xf32>
    %c0_4 = arith.constant 0 : index
    %c0_5 = arith.constant 0 : index
    %6 = vector.load %arg5[%c0_4, %c0_5] : memref<1x128xf32, #tpu.memory_space<vmem>>, vector<1x128xf32>
    %7 = vector.broadcast %6 : vector<1x128xf32> to vector<16x128xf32>
    %8 = arith.addf %5, %7 : vector<16x128xf32>
    %cst_6 = arith.constant 0.000000e+00 : f32
    %9 = vector.broadcast %cst_6 : f32 to vector<16x128xf32>
    %10 = arith.maximumf %8, %9 : vector<16x128xf32>
    %c0_7 = arith.constant 0 : index
    %c0_8 = arith.constant 0 : index
    %11 = vector.load %arg9[%c0_7, %c0_8] : memref<16x128xf32, #tpu.memory_space<vmem>>, vector<16x128xf32>
    %12 = arith.truncf %10 : vector<16x128xf32> to vector<16x128xbf16>
    %c0_9 = arith.constant 0 : index
    %c0_10 = arith.constant 0 : index
    %13 = vector.load %arg6[%c0_9, %c0_10] : memref<128x128xbf16, #tpu.memory_space<vmem>>, vector<128x128xbf16>
    %cst_11 = arith.constant dense<0.000000e+00> : vector<16x128xf32>
    %14 = tpu.matmul %12, %13, %cst_11 {dimension_numbers = #tpu.dot_dimension_numbers<[1], [0], [0], [1], [0, 0, 1, 1], [], []>} : vector<16x128xbf16>, vector<128x128xbf16>, vector<16x128xf32> -> vector<16x128xf32>
    %15 = arith.addf %11, %14 : vector<16x128xf32>
    %c0_12 = arith.constant 0 : index
    %c0_13 = arith.constant 0 : index
    %16 = vector.load %arg9[%c0_12, %c0_13] : memref<16x128xf32, #tpu.memory_space<vmem>>, vector<16x128xf32>
    tpu.vector_store %arg9[%c0_12, %c0_13], %15 {strides = array<i32>} : memref<16x128xf32, #tpu.memory_space<vmem>>, vector<16x128xf32>,
    %c0_i32_14 = arith.constant 0 : i32
    %17 = arith.cmpi eq, %arg1, %c0_i32_14 : i32
    %18 = arith.extui %17 : i1 to i32
    %c0_i32_15 = arith.constant 0 : i32
    %19 = arith.cmpi ne, %18, %c0_i32_15 : i32
    scf.if %19 {
      %c0_16 = arith.constant 0 : index
      %c0_17 = arith.constant 0 : index
      %20 = vector.load %arg9[%c0_16, %c0_17] : memref<16x128xf32, #tpu.memory_space<vmem>>, vector<16x128xf32>
      %c0_18 = arith.constant 0 : index
      %c0_19 = arith.constant 0 : index
      %21 = vector.load %arg7[%c0_18, %c0_19] : memref<1x128xf32, #tpu.memory_space<vmem>>, vector<1x128xf32>
      %22 = vector.broadcast %21 : vector<1x128xf32> to vector<16x128xf32>
      %23 = arith.addf %20, %22 : vector<16x128xf32>
      %c0_20 = arith.constant 0 : index
      %c0_21 = arith.constant 0 : index
      %24 = vector.load %arg8[%c0_20, %c0_21] : memref<16x128xf32, #tpu.memory_space<vmem>>, vector<16x128xf32>
      tpu.vector_store %arg8[%c0_20, %c0_21], %23 {strides = array<i32>} : memref<16x128xf32, #tpu.memory_space<vmem>>, vector<16x128xf32>,
    } else {
    }
    return
  }
  func.func @transform_0(%arg0: i32, %arg1: i32, %arg2: memref<1xi32, #tpu.memory_space<smem>>) -> (i32, i32) {
    %c0_i32 = arith.constant 0 : i32
    %c0_i32_0 = arith.constant 0 : i32
    return %arg0, %c0_i32 : i32, i32
  }
  func.func @transform_1(%arg0: i32, %arg1: i32, %arg2: memref<1xi32, #tpu.memory_space<smem>>) -> (i32, i32) {
    %c0_i32 = arith.constant 0 : i32
    %c0_i32_0 = arith.constant 0 : i32
    return %c0_i32, %arg1 : i32, i32
  }
  func.func @transform_2(%arg0: i32, %arg1: i32, %arg2: memref<1xi32, #tpu.memory_space<smem>>) -> (i32, i32) {
    %c0_i32 = arith.constant 0 : i32
    %c0_i32_0 = arith.constant 0 : i32
    return %c0_i32, %arg1 : i32, i32
  }
  func.func @transform_3(%arg0: i32, %arg1: i32, %arg2: memref<1xi32, #tpu.memory_space<smem>>) -> (i32, i32) {
    %c0_i32 = arith.constant 0 : i32
    %c0_i32_0 = arith.constant 0 : i32
    return %arg1, %c0_i32 : i32, i32
  }
  func.func @transform_4(%arg0: i32, %arg1: i32, %arg2: memref<1xi32, #tpu.memory_space<smem>>) -> (i32, i32) {
    %c0_i32 = arith.constant 0 : i32
    %c0_i32_0 = arith.constant 0 : i32
    %c0_i32_1 = arith.constant 0 : i32
    return %c0_i32, %c0_i32_0 : i32, i32
  }
  func.func @transform_5(%arg0: i32, %arg1: i32, %arg2: memref<1xi32, #tpu.memory_space<smem>>) -> (i32, i32) {
    %c0_i32 = arith.constant 0 : i32
    %c0_i32_0 = arith.constant 0 : i32
    return %arg0, %c0_i32 : i32, i32
  }
}

</mosaic_0001>

<llo_original>
// kernel: tpu_custom_call.1
$region0: #{tpu_custom_call.1}
  #allocation0 [shape = 'u32[]', space=smem, size = 0x4, offset = 0x4, fixed_abs, tag = 'smem constant byte address 0x4 - core index']
  #allocation1 [shape = 'u32[144,128]{1,0:T(1,128)}', space=vmem, size = 0x12000, scoped, tag = 'internal scratch']
  #allocation2 [shape = 'f32[16,128]{1,0:T(8,128)}', space=vmem, size = 0x2000, scoped, tag = 'scratch operand']
  #allocation3 [shape = 's32[1]{0}', space=sflag, size = 0x4, scoped, tag = 'scoped memory for tpu_custom_call.1']
  #allocation4 [shape = 's32[1]{0:T(128)S(6)}', space=smem, size = 0x200, scoped, tag = 'prefetched SMEM operand 0']
  %s0 = inlined_call_operand.<no memory space> [shape: s32[1], index: 0, kind: input, shape index: {}]
  %s1 = inlined_call_operand.hbm [shape: bf16[16,128], index: 1, kind: input, shape index: {}]
  %s2 = inlined_call_operand.hbm [shape: bf16[128,128], index: 2, kind: input, shape index: {}]
  %s3 = inlined_call_operand.vmem [shape: f32[1,128], index: 3, kind: input, shape index: {}]
  %s4 = inlined_call_operand.hbm [shape: bf16[128,128], index: 4, kind: input, shape index: {}]
  %s5 = inlined_call_operand.vmem [shape: f32[1,128], index: 5, kind: input, shape index: {}]
  %s6 = inlined_call_operand.hbm [shape: f32[16,128], index: 6, kind: output, shape index: {}]
  %s7 = sld [smem:[#allocation0]]
  $region50: #{tpu_custom_call.1} parent=0
    _
  %s9 = ssub.s32 1, %s7
  %s10 = scalar_select 0, %s9, %s7
  %11 = sst [smem:[#allocation4]] %s0
  $region1: #{tpu_custom_call.1} parent=0
    #allocation5 [shape = 'u8[4096]{0}', space=vmem, size = 0x1000, scoped, tag = 'input window, operand 1, single buffered']
    #allocation6 [shape = 's32[1]{0}', space=sflag, size = 0x4, scoped, tag = 'scoped memory for tpu_custom_call.1']
    #allocation7 [shape = 's32[1]{0}', space=sflag, size = 0x4, scoped, tag = 'scoped memory for tpu_custom_call.1']
    #allocation8 [shape = 'u8[32768]{0}', space=vmem, size = 0x8000, scoped, tag = 'input window, operand 2, single buffered']
    #allocation9 [shape = 's32[1]{0}', space=sflag, size = 0x4, scoped, tag = 'scoped memory for tpu_custom_call.1']
    #allocation10 [shape = 'u8[32768]{0}', space=vmem, size = 0x8000, scoped, tag = 'input window, operand 4, single buffered']
    #allocation11 [shape = 'u8[8192]{0}', space=vmem, size = 0x2000, scoped, tag = 'output window, operand 0, single buffered']
    %12 = vsyncpa [#allocation6], 0
    %13 = vsyncpa [#allocation9], 0
    %14 = vsyncpa [#allocation7], 0
    // Predicated region
    $region2: #{tpu_custom_call.1} parent=1 // pred_check
      _
    $region3: #{tpu_custom_call.1} parent=1 // pred_check_branch
      %16 = sbr.rel (0) target = $region5
    $region4: #{tpu_custom_call.1} parent=1 // pred_region
      %s18 = ssub.s32 128, 128
      %19 = vsyncadd [#allocation6], %s18
      %s20 = sshll.u32 [#allocation5], 4
      %s21 = int_to_ptr.vmem [resolvable:$true] %s20
      %26 = dma.hbm_to_vmem [thread:$0]  %s1, 128, %s21, [#allocation6], 64, 64, 4
    $region5: #{tpu_custom_call.1} parent=1 // pred_fallthru
      _
    // Predicated region
    $region6: #{tpu_custom_call.1} parent=1 // pred_check
      _
    $region7: #{tpu_custom_call.1} parent=1 // pred_check_branch
      %28 = sbr.rel (0) target = $region9
    $region8: #{tpu_custom_call.1} parent=1 // pred_region
      %s30 = ssub.s32 1024, 1024
      %31 = vsyncadd [#allocation9], %s30
      %s32 = sshll.u32 [#allocation8], 4
      %s33 = int_to_ptr.vmem [resolvable:$true] %s32
      %38 = dma.hbm_to_vmem [thread:$0]  %s2, 1024, %s33, [#allocation9], 64, 64, 4
    $region9: #{tpu_custom_call.1} parent=1 // pred_fallthru
      _
    // Predicated region
    $region10: #{tpu_custom_call.1} parent=1 // pred_check
      _
    $region11: #{tpu_custom_call.1} parent=1 // pred_check_branch
      %40 = sbr.rel (0) target = $region13
    $region12: #{tpu_custom_call.1} parent=1 // pred_region
      _
    $region13: #{tpu_custom_call.1} parent=1 // pred_fallthru
      _
    // Predicated region
    $region14: #{tpu_custom_call.1} parent=1 // pred_check
      _
    $region15: #{tpu_custom_call.1} parent=1 // pred_check_branch
      %42 = sbr.rel (0) target = $region17
    $region16: #{tpu_custom_call.1} parent=1 // pred_region
      %s44 = ssub.s32 1024, 1024
      %45 = vsyncadd [#allocation9], %s44
      %s46 = sshll.u32 [#allocation10], 4
      %s47 = int_to_ptr.vmem [resolvable:$true] %s46
      %52 = dma.hbm_to_vmem [thread:$0]  %s4, 1024, %s47, [#allocation9], 64, 64, 4
    $region17: #{tpu_custom_call.1} parent=1 // pred_fallthru
      _
    // Predicated region
    $region18: #{tpu_custom_call.1} parent=1 // pred_check
      _
    $region19: #{tpu_custom_call.1} parent=1 // pred_check_branch
      %54 = sbr.rel (0) target = $region21
    $region20: #{tpu_custom_call.1} parent=1 // pred_region
      _
    $region21: #{tpu_custom_call.1} parent=1 // pred_fallthru
      _
    // Predicated region
    $region22: #{tpu_custom_call.1} parent=1 // pred_check
      _
    $region23: #{tpu_custom_call.1} parent=1 // pred_check_branch
      %56 = sbr.rel (0) target = $region25
    $region24: #{tpu_custom_call.1} parent=1 // pred_region
      %57 = dma.done [#allocation6], 128
    $region25: #{tpu_custom_call.1} parent=1 // pred_fallthru
      _
    // Predicated region
    $region26: #{tpu_custom_call.1} parent=1 // pred_check
      _
    $region27: #{tpu_custom_call.1} parent=1 // pred_check_branch
      %59 = sbr.rel (0) target = $region29
    $region28: #{tpu_custom_call.1} parent=1 // pred_region
      %60 = dma.done [#allocation9], 1024
    $region29: #{tpu_custom_call.1} parent=1 // pred_fallthru
      _
    // Predicated region
    $region30: #{tpu_custom_call.1} parent=1 // pred_check
      _
    $region31: #{tpu_custom_call.1} parent=1 // pred_check_branch
      %62 = sbr.rel (0) target = $region33
    $region32: #{tpu_custom_call.1} parent=1 // pred_region
      %63 = dma.done [#allocation9], 1024
    $region33: #{tpu_custom_call.1} parent=1 // pred_fallthru
      _
    %p65 = scmp.eq.s32.totalorder 0, 0
    // Predicated region
    $region34: #{tpu_custom_call.1} parent=1 // pred_check
      %p66 = pneg %p65
    $region35: #{tpu_custom_call.1} parent=1 // pred_check_branch
      %68 = sbr.rel (%p66) target = $region37
    $region36: #{tpu_custom_call.1} parent=1 // pred_region
      %69 = vst [vmem:[#allocation2] sm:$0xff] 0.0
      %70 = vst [vmem:[#allocation2 + $0x8] sm:$0xff] 0.0
    $region37: #{tpu_custom_call.1} parent=1 // pred_fallthru
      _
    %v71 = vld [vmem:[#allocation5] sm:$0xf]
    %v72 = vld [vmem:[#allocation5 + $0x4] sm:$0xf]
    %v73 = vld [vmem:[#allocation8] sm:$0xf]
    %v74 = vld [vmem:[#allocation8 + $0x4] sm:$0xf]
    %v75 = vld [vmem:[#allocation8 + $0x8] sm:$0xf]
    %v76 = vld [vmem:[#allocation8 + $0xc] sm:$0xf]
    %v77 = vld [vmem:[#allocation8 + $0x10] sm:$0xf]
    %v78 = vld [vmem:[#allocation8 + $0x14] sm:$0xf]
    %v79 = vld [vmem:[#allocation8 + $0x18] sm:$0xf]
    %v80 = vld [vmem:[#allocation8 + $0x1c] sm:$0xf]
    %v81 = vld [vmem:[#allocation8 + $0x20] sm:$0xf]
    %v82 = vld [vmem:[#allocation8 + $0x24] sm:$0xf]
    %v83 = vld [vmem:[#allocation8 + $0x28] sm:$0xf]
    %v84 = vld [vmem:[#allocation8 + $0x2c] sm:$0xf]
    %v85 = vld [vmem:[#allocation8 + $0x30] sm:$0xf]
    %v86 = vld [vmem:[#allocation8 + $0x34] sm:$0xf]
    %v87 = vld [vmem:[#allocation8 + $0x38] sm:$0xf]
    %v88 = vld [vmem:[#allocation8 + $0x3c] sm:$0xf]
    %v89 = vld [vmem:[%s3] sm:$0x1]
    %v91 = vlaneseq
    %v92 = vshrl.u32 %v91, 7
    %v93 = vsub.s32 0, %v92
    %v94 = vrot.slane %v89, %v93
    %v98 = vunpack.c.l.b16 %v71
    %v99 = vunpack.c.l.b16 %v72
    %v100 = vpack.c.b16 %v99, %v98
    %v118 = vunpack.c.l.b16 %v73
    %v119 = vunpack.c.l.b16 %v74
    %v120 = vunpack.c.l.b16 %v75
    %v121 = vunpack.c.l.b16 %v76
    %v122 = vunpack.c.l.b16 %v77
    %v123 = vunpack.c.l.b16 %v78
    %v124 = vunpack.c.l.b16 %v79
    %v125 = vunpack.c.l.b16 %v80
    %v126 = vunpack.c.l.b16 %v81
    %v127 = vunpack.c.l.b16 %v82
    %v128 = vunpack.c.l.b16 %v83
    %v129 = vunpack.c.l.b16 %v84
    %v130 = vunpack.c.l.b16 %v85
    %v131 = vunpack.c.l.b16 %v86
    %v132 = vunpack.c.l.b16 %v87
    %v133 = vunpack.c.l.b16 %v88
    %v134 = vpack.c.b16 %v119, %v118
    %v135 = vpack.c.b16 %v121, %v120
    %v136 = vpack.c.b16 %v123, %v122
    %v137 = vpack.c.b16 %v125, %v124
    %v138 = vpack.c.b16 %v127, %v126
    %v139 = vpack.c.b16 %v129, %v128
    %v140 = vpack.c.b16 %v131, %v130
    %v141 = vpack.c.b16 %v133, %v132
    %150 = vmatprep.subr.bf16.mxu0 0
    %151 = vmatpush1.bf16.msra.mxu0 %v134
    %152 = vmatprep.subr.bf16.mxu0 0
    %153 = vmatpush1.bf16.msra.mxu0 %v135
    %154 = vmatprep.subr.bf16.mxu0 0
    %155 = vmatpush1.bf16.msra.mxu0 %v136
    %156 = vmatprep.subr.bf16.mxu0 0
    %157 = vmatpush1.bf16.msra.mxu0 %v137
    %158 = vmatprep.subr.bf16.mxu0 0
    %159 = vmatpush1.bf16.msra.mxu0 %v138
    %160 = vmatprep.subr.bf16.mxu0 0
    %161 = vmatpush1.bf16.msra.mxu0 %v139
    %162 = vmatprep.subr.bf16.mxu0 0
    %163 = vmatpush1.bf16.msra.mxu0 %v140
    %164 = vmatprep.subr.bf16.mxu0 0
    %165 = vmatpush1.bf16.msra.mxu0 %v141
    %166 = vmatprep.subr.bf16.mxu0 0
    %167 = vmatpush1.bf16.msra.mxu0 0
    %168 = vmatprep.subr.bf16.mxu0 0
    %169 = vmatpush1.bf16.msra.mxu0 0
    %170 = vmatprep.subr.bf16.mxu0 0
    %171 = vmatpush1.bf16.msra.mxu0 0
    %172 = vmatprep.subr.bf16.mxu0 0
    %173 = vmatpush1.bf16.msra.mxu0 0
    %174 = vmatprep.subr.bf16.mxu0 0
    %175 = vmatpush1.bf16.msra.mxu0 0
    %176 = vmatprep.subr.bf16.mxu0 0
    %177 = vmatpush1.bf16.msra.mxu0 0
    %178 = vmatprep.subr.bf16.mxu0 0
    %179 = vmatpush1.bf16.msra.mxu0 0
    %180 = vmatprep.subr.bf16.mxu0 0
    %181 = vmatpush1.bf16.msra.mxu0 0
    %182 = vmatprep.mubr.bf16.mxu0 0
    %183 = vmatmul.mubr.bf16.gmra.mrb[0].mxu0 %v100
    %v184 = vpop.f32.mrb[0].mxu0
    %v185 = vadd.f32 %v94, %v184
    %v186 = vpop.f32.mrb[0].mxu0
    %v187 = vpop.f32.mrb[0].mxu0
    %v188 = vadd.f32 %v94, %v187
    %v189 = vpop.f32.mrb[0].mxu0
    %190 = vdwg.mxu0
    %v191 = vmax.f32 %v185, 0.0
    %v192 = vmax.f32 %v188, 0.0
    %v193 = vld [vmem:[#allocation2] sm:$0xff]
    %v194 = vld [vmem:[#allocation2 + $0x8] sm:$0xff]
    %v195 = vpack.c.bf16 %v192, %v191
    %v196 = vld [vmem:[#allocation10] sm:$0xf]
    %v197 = vld [vmem:[#allocation10 + $0x4] sm:$0xf]
    %v198 = vld [vmem:[#allocation10 + $0x8] sm:$0xf]
    %v199 = vld [vmem:[#allocation10 + $0xc] sm:$0xf]
    %v200 = vld [vmem:[#allocation10 + $0x10] sm:$0xf]
    %v201 = vld [vmem:[#allocation10 + $0x14] sm:$0xf]
    %v202 = vld [vmem:[#allocation10 + $0x18] sm:$0xf]
    %v203 = vld [vmem:[#allocation10 + $0x1c] sm:$0xf]
    %v204 = vld [vmem:[#allocation10 + $0x20] sm:$0xf]
    %v205 = vld [vmem:[#allocation10 + $0x24] sm:$0xf]
    %v206 = vld [vmem:[#allocation10 + $0x28] sm:$0xf]
    %v207 = vld [vmem:[#allocation10 + $0x2c] sm:$0xf]
    %v208 = vld [vmem:[#allocation10 + $0x30] sm:$0xf]
    %v209 = vld [vmem:[#allocation10 + $0x34] sm:$0xf]
    %v210 = vld [vmem:[#allocation10 + $0x38] sm:$0xf]
    %v211 = vld [vmem:[#allocation10 + $0x3c] sm:$0xf]
    %v228 = vunpack.c.l.b16 %v196
    %v229 = vunpack.c.l.b16 %v197
    %v230 = vunpack.c.l.b16 %v198
    %v231 = vunpack.c.l.b16 %v199
    %v232 = vunpack.c.l.b16 %v200
    %v233 = vunpack.c.l.b16 %v201
    %v234 = vunpack.c.l.b16 %v202
    %v235 = vunpack.c.l.b16 %v203
    %v236 = vunpack.c.l.b16 %v204
    %v237 = vunpack.c.l.b16 %v205
    %v238 = vunpack.c.l.b16 %v206
    %v239 = vunpack.c.l.b16 %v207
    %v240 = vunpack.c.l.b16 %v208
    %v241 = vunpack.c.l.b16 %v209
    %v242 = vunpack.c.l.b16 %v210
    %v243 = vunpack.c.l.b16 %v211
    %v244 = vpack.c.b16 %v229, %v228
    %v245 = vpack.c.b16 %v231, %v230
    %v246 = vpack.c.b16 %v233, %v232
    %v247 = vpack.c.b16 %v235, %v234
    %v248 = vpack.c.b16 %v237, %v236
    %v249 = vpack.c.b16 %v239, %v238
    %v250 = vpack.c.b16 %v241, %v240
    %v251 = vpack.c.b16 %v243, %v242
    %260 = vmatprep.subr.bf16.mxu0 0
    %261 = vmatpush1.bf16.msra.mxu0 %v244
    %262 = vmatprep.subr.bf16.mxu0 0
    %263 = vmatpush1.bf16.msra.mxu0 %v245
    %264 = vmatprep.subr.bf16.mxu0 0
    %265 = vmatpush1.bf16.msra.mxu0 %v246
    %266 = vmatprep.subr.bf16.mxu0 0
    %267 = vmatpush1.bf16.msra.mxu0 %v247
    %268 = vmatprep.subr.bf16.mxu0 0
    %269 = vmatpush1.bf16.msra.mxu0 %v248
    %270 = vmatprep.subr.bf16.mxu0 0
    %271 = vmatpush1.bf16.msra.mxu0 %v249
    %272 = vmatprep.subr.bf16.mxu0 0
    %273 = vmatpush1.bf16.msra.mxu0 %v250
    %274 = vmatprep.subr.bf16.mxu0 0
    %275 = vmatpush1.bf16.msra.mxu0 %v251
    %276 = vmatprep.subr.bf16.mxu0 0
    %277 = vmatpush1.bf16.msra.mxu0 0
    %278 = vmatprep.subr.bf16.mxu0 0
    %279 = vmatpush1.bf16.msra.mxu0 0
    %280 = vmatprep.subr.bf16.mxu0 0
    %281 = vmatpush1.bf16.msra.mxu0 0
    %282 = vmatprep.subr.bf16.mxu0 0
    %283 = vmatpush1.bf16.msra.mxu0 0
    %284 = vmatprep.subr.bf16.mxu0 0
    %285 = vmatpush1.bf16.msra.mxu0 0
    %286 = vmatprep.subr.bf16.mxu0 0
    %287 = vmatpush1.bf16.msra.mxu0 0
    %288 = vmatprep.subr.bf16.mxu0 0
    %289 = vmatpush1.bf16.msra.mxu0 0
    %290 = vmatprep.subr.bf16.mxu0 0
    %291 = vmatpush1.bf16.msra.mxu0 0
    %292 = vmatprep.mubr.bf16.mxu0 0
    %293 = vmatmul.mubr.bf16.gmra.mrb[0].mxu0 %v195
    %v294 = vpop.f32.mrb[0].mxu0
    %v295 = vadd.f32 0.0, %v294
    %v296 = vpop.f32.mrb[0].mxu0
    %v297 = vpop.f32.mrb[0].mxu0
    %v298 = vadd.f32 0.0, %v297
    %v299 = vpop.f32.mrb[0].mxu0
    %300 = vdwg.mxu0
    %v301 = vadd.f32 %v193, %v295
    %v302 = vadd.f32 %v194, %v298
    %303 = vst [vmem:[#allocation2] sm:$0xff] %v301
    %304 = vst [vmem:[#allocation2 + $0x8] sm:$0xff] %v302
    // Predicated region
    $region38: #{tpu_custom_call.1} parent=1 // pred_check
      %p305 = pneg %p65
    $region39: #{tpu_custom_call.1} parent=1 // pred_check_branch
      %307 = sbr.rel (%p305) target = $region41
    $region40: #{tpu_custom_call.1} parent=1 // pred_region
      %v308 = vld [vmem:[#allocation2] sm:$0xff]
      %v309 = vld [vmem:[#allocation2 + $0x8] sm:$0xff]
      %v310 = vld [vmem:[%s5] sm:$0x1]
      %v312 = vlaneseq
      %v313 = vshrl.u32 %v312, 7
      %v314 = vsub.s32 0, %v313
      %v315 = vrot.slane %v310, %v314
      %v317 = vadd.f32 %v308, %v315
      %v318 = vadd.f32 %v309, %v315
      %319 = vst [vmem:[#allocation11] sm:$0xff] %v317
      %320 = vst [vmem:[#allocation11 + $0x8] sm:$0xff] %v318
    $region41: #{tpu_custom_call.1} parent=1 // pred_fallthru
      _
    // Predicated region
    $region42: #{tpu_custom_call.1} parent=1 // pred_check
      _
    $region43: #{tpu_custom_call.1} parent=1 // pred_check_branch
      %322 = sbr.rel (0) target = $region45
    $region44: #{tpu_custom_call.1} parent=1 // pred_region
      %s324 = ssub.s32 256, 256
      %325 = vsyncadd [#allocation7], %s324
      %s326 = sshll.u32 [#allocation11], 4
      %s327 = int_to_ptr.vmem [resolvable:$true] %s326
      %332 = dma.vmem_to_hbm [thread:$0]  %s327, 256, %s6, [#allocation7], 128, 128, 8
    $region45: #{tpu_custom_call.1} parent=1 // pred_fallthru
      _
    // Predicated region
    $region46: #{tpu_custom_call.1} parent=1 // pred_check
      _
    $region47: #{tpu_custom_call.1} parent=1 // pred_check_branch
      %334 = sbr.rel (0) target = $region49
    $region48: #{tpu_custom_call.1} parent=1 // pred_region
      %335 = dma.done [#allocation7], 256
    $region49: #{tpu_custom_call.1} parent=1 // pred_fallthru
      _
    %336 = vsyncpa [#allocation6], 1
    %337 = vsyncpa [#allocation9], 1
    %338 = vsyncpa [#allocation7], 1

</llo_original>
